<compile_context>
chip_gen: v7x
topology: tpu7x:2x2x1
jax: 0.10.0
libtpu: 0.0.40
codegen_flags: <defaults>
</compile_context>

<pallas_src>
import functools
from dataclasses import dataclass

import jax
import jax.numpy as jnp
from jax.experimental import pallas as pl
from jax.experimental.pallas import tpu as pltpu


@jax.tree_util.register_pytree_node_class
@dataclass
class ModulationOut:
    shift: jax.Array
    scale: jax.Array
    gate: jax.Array

    def tree_flatten(self):
        return (self.shift, self.scale, self.gate), None

    @classmethod
    def tree_unflatten(cls, aux, children):
        del aux
        return cls(*children)


# Per-weight-buffer budget and pipelining depth.  3 x 12 MB weight buffers
# (+ resident vec, bias tile, output tile) stay inside v7x's 64 MiB physical
# VMEM and are trivially inside v5e/v6e's 128 MiB.
_WEIGHT_BUFFER_BYTES = 12 << 20
_WEIGHT_BUFFER_COUNT = 3
_VMEM_LIMIT_BYTES = 52 << 20   # <= ~52-56 MB so the limit is also valid on v7x


def _modulation_kernel(vec_ref, w_ref, b_ref, out_ref):
    """One N-tile of: silu(vec) @ W[:, j*TN:(j+1)*TN] + b[j*TN:(j+1)*TN]."""
    x = vec_ref[...].astype(jnp.float32)
    # SiLU: sigmoid lowers to the EUP slot; vec is tiny so per-tile recompute
    # is free relative to the streamed weight DMA.
    x = x * jax.nn.sigmoid(x)
    # Feed the MXU at the weight's native precision (bf16 stream), accumulate f32.
    x = x.astype(w_ref.dtype)
    acc = jnp.dot(x, w_ref[...], preferred_element_type=jnp.float32)
    acc = acc + b_ref[...].astype(jnp.float32)
    out_ref[...] = acc.astype(out_ref.dtype)


def _pick_tile_n(dim: int, out_dim: int, itemsize: int,
                 budget_bytes: int = _WEIGHT_BUFFER_BYTES) -> int:
    """Lane-dense N tile for the streamed weight.

    Preference order:
      1. the whole weight if it fits one buffer,
      2. the largest multiple-of-128 divisor of out_dim within budget whose
         (short) grid has an even tile count (balanced 2-TC split on v7x),
      3. the largest multiple-of-128 divisor of out_dim within budget,
      4. the largest multiple-of-128 tile within budget (masked trailing tile).
    """
    if dim * out_dim * itemsize <= budget_bytes:
        return out_dim
    tn_max = (budget_bytes // (dim * itemsize)) // 128 * 128
    if tn_max < 128:
        # TODO(synk): tile K with an f32 accumulator scratch (P3 pattern) once
        # dim*itemsize*128 exceeds the per-buffer budget, instead of failing.
        raise ValueError(
            f"dim={dim} (itemsize={itemsize}) needs K tiling: a single 128-lane "
            f"weight column tile exceeds the {budget_bytes}-byte VMEM budget")
    divisors = [t for t in range(tn_max, 127, -128) if out_dim % t == 0]
    for t in divisors:                       # descending -> largest first
        g = out_dim // t
        if g % 2 == 0 and g <= 16:           # short grid: prefer even v7x split
            return t
    if divisors:
        return divisors[0]
    return tn_max                            # partial trailing tile (masked)


@functools.partial(jax.jit, static_argnames=("is_double", "weight_buffer_bytes"))
def modulation_forward(vec, w_t, b, *, is_double: bool,
                       weight_buffer_bytes: int = _WEIGHT_BUFFER_BYTES):
    """vec: (B, dim); w_t: (dim, multiplier*dim); b: (1, multiplier*dim)."""
    B, dim = vec.shape
    out_dim = w_t.shape[1]
    multiplier = 6 if is_double else 3
    assert out_dim == multiplier * dim
    assert b.shape == (1, out_dim)

    tn = _pick_tile_n(dim, out_dim, w_t.dtype.itemsize, weight_buffer_bytes)
    num_tiles = pl.cdiv(out_dim, tn)
    grid = (num_tiles,)

    # Triple-buffer the streamed weight only when there is a stream to hide;
    # a 1-2 tile grid keeps Pallas' default double-buffering.
    if num_tiles >= 3:
        w_spec = pl.BlockSpec((dim, tn), lambda j: (0, j),
                              pipeline_mode=pl.Buffered(_WEIGHT_BUFFER_COUNT))
    else:
        w_spec = pl.BlockSpec((dim, tn), lambda j: (0, j))

    bytes_accessed = (dim * out_dim * w_t.dtype.itemsize      # streamed weight
                      + B * dim * vec.dtype.itemsize          # resident vec
                      + out_dim * b.dtype.itemsize            # bias
                      + B * out_dim * vec.dtype.itemsize)     # output

    out = pl.pallas_call(
        _modulation_kernel,
        out_shape=jax.ShapeDtypeStruct((B, out_dim), vec.dtype),
        grid=grid,
        in_specs=[
            pl.BlockSpec((B, dim), lambda j: (0, 0)),    # vec: resident
            w_spec,                                      # weight: streamed N tiles
            pl.BlockSpec((1, tn), lambda j: (0, j)),     # bias: streamed N tiles
        ],
        out_specs=pl.BlockSpec((B, tn), lambda j: (0, j)),
        compiler_params=pltpu.CompilerParams(
            dimension_semantics=("parallel",),           # shard N across v7x TCs
            vmem_limit_bytes=_VMEM_LIMIT_BYTES,
        ),
        cost_estimate=pl.CostEstimate(
            flops=2 * B * dim * out_dim,
            transcendentals=num_tiles * B * dim,         # silu recomputed per tile
            bytes_accessed=bytes_accessed,
        ),
    )(vec, w_t, b)
    # TODO(synk): optional int8 (v5e/v6e) / fp8-e4m3 (v7x) weight path with a
    # per-output-channel scale input and a single post-dot scale multiply.

    # Single metadata reshape instead of six wrapper slices:
    # (B, multiplier*dim) -> (B, multiplier, 1, dim); out[:, i] is (B, 1, dim).
    out = out.reshape(B, multiplier, 1, dim)
    first = ModulationOut(out[:, 0], out[:, 1], out[:, 2])
    second = ModulationOut(out[:, 3], out[:, 4], out[:, 5]) if is_double else None
    return first, second


def init_modulation_params(key, dim: int, double: bool, dtype=jnp.bfloat16):
    """Synthetic init matching nn.Linear(dim, multiplier*dim) shapes.

    Default dtype is bf16: the kernel is HBM-bound on the weight stream, so a
    narrow weight dtype is the single biggest perf lever.
    """
    multiplier = 6 if double else 3
    k_w, k_b = jax.random.split(key)
    bound = 1.0 / (dim ** 0.5)
    # PyTorch stores weight as (out, in); pre-transpose to (in, out) so the
    # kernel does a plain row-major matmul on the MXU.
    w = jax.random.uniform(k_w, (multiplier * dim, dim), jnp.float32, -bound, bound)
    b = jax.random.uniform(k_b, (multiplier * dim,), jnp.float32, -bound, bound)
    return w.T.astype(dtype), b.reshape(1, -1).astype(dtype)


def _modulation_reference(vec, w_t, b, multiplier):
    """Plain-JAX reference following the same mixed-precision path."""
    x = vec.astype(jnp.float32)
    x = x * jax.nn.sigmoid(x)
    x = x.astype(w_t.dtype)
    out = jnp.dot(x, w_t, preferred_element_type=jnp.float32) + b.astype(jnp.float32)
    out = out.astype(vec.dtype)[:, None, :]
    dim = vec.shape[1]
    return [out[..., i * dim:(i + 1) * dim] for i in range(multiplier)]


if __name__ == "__main__":
    key = jax.random.PRNGKey(0)
    k_v1, k_p1, k_v2, k_p2, k_v3, k_p3 = jax.random.split(key, 6)

    # --- 1) small double-path test: bf16 weights, single N tile ------------
    B, dim = 2, 32
    vec = jax.random.normal(k_v1, (B, dim), jnp.float32)
    w_t, b = init_modulation_params(k_p1, dim, double=True, dtype=jnp.bfloat16)
    mod1, mod2 = modulation_forward(vec, w_t, b, is_double=True)
    jax.block_until_ready(mod1.shift)
    ref = _modulation_reference(vec, w_t, b, 6)
    got = [mod1.shift, mod1.scale, mod1.gate, mod2.shift, mod2.scale, mod2.gate]
    for r, g in zip(ref, got):
        assert g.shape == (B, 1, dim), g.shape
        assert jnp.allclose(r, g, atol=2e-2, rtol=2e-2), float(jnp.max(jnp.abs(r - g)))

    # --- 2) single (non-double) path ----------------------------------------
    w_t3, b3 = init_modulation_params(k_p1, dim, double=False, dtype=jnp.bfloat16)
    m1, m2 = modulation_forward(vec, w_t3, b3, is_double=False)
    jax.block_until_ready(m1.shift)
    assert m2 is None and m1.gate.shape == (B, 1, dim)
    ref3 = _modulation_reference(vec, w_t3, b3, 3)
    for r, g in zip(ref3, [m1.shift, m1.scale, m1.gate]):
        assert jnp.allclose(r, g, atol=2e-2, rtol=2e-2)

    # --- 3) multi-tile + Buffered(3) path (budget override forces tiling) ---
    B2, dim2 = 2, 256
    vec2 = jax.random.normal(k_v2, (B2, dim2), jnp.float32)
    w_t2, b2 = init_modulation_params(k_p2, dim2, double=True, dtype=jnp.bfloat16)
    # 384-column bf16 tiles -> grid of 4, exercises triple-buffered stream.
    d1, d2 = modulation_forward(vec2, w_t2, b2, is_double=True,
                                weight_buffer_bytes=256 * 2 * 384)
    jax.block_until_ready(d1.shift)
    ref2 = _modulation_reference(vec2, w_t2, b2, 6)
    got2 = [d1.shift, d1.scale, d1.gate, d2.shift, d2.scale, d2.gate]
    for r, g in zip(ref2, got2):
        assert jnp.allclose(r, g, atol=2e-2, rtol=2e-2), float(jnp.max(jnp.abs(r - g)))

    # --- 4) non-dividing shape: trailing partial N tile (masked writes) -----
    B3, dim3 = 2, 320
    vec3 = jax.random.normal(k_v3, (B3, dim3), jnp.float32)
    w_t4, b4 = init_modulation_params(k_p3, dim3, double=False, dtype=jnp.float32)
    # 256-column f32 tiles over out_dim=960 -> grid of 4 with a 192-wide tail.
    s1, s2 = modulation_forward(vec3, w_t4, b4, is_double=False,
                                weight_buffer_bytes=320 * 4 * 256)
    jax.block_until_ready(s1.shift)
    assert s2 is None
    ref4 = _modulation_reference(vec3, w_t4, b4, 3)
    for r, g in zip(ref4, [s1.shift, s1.scale, s1.gate]):
        assert jnp.allclose(r, g, atol=1e-5, rtol=1e-5), float(jnp.max(jnp.abs(r - g)))

    print("KERNEL_OK")
</pallas_src>

<mosaic_0001>
module attributes {stable_mosaic.version = 11 : i64} {
  func.func @_modulation_kernel(%arg0: i32, %arg1: memref<2x32xf32, #tpu.memory_space<vmem>>, %arg2: memref<32x192xbf16, #tpu.memory_space<vmem>>, %arg3: memref<1x192xbf16, #tpu.memory_space<vmem>>, %arg4: memref<2x192xf32, #tpu.memory_space<vmem>>) attributes {dimension_semantics = [#tpu.dimension_semantics<parallel>], iteration_bounds = array<i64: 1>, scalar_prefetch = 0 : i64, scratch_operands = 0 : i64, tpu.core_type = #tpu.core_type<tc>, window_params = [{pipeline_mode = #tpu.pipeline_mode<synchronous>, transform_indices = @transform_0, window_bounds = array<i64: 2, 32>}, {transform_indices = @transform_1, window_bounds = array<i64: 32, 192>}, {transform_indices = @transform_2, window_bounds = array<i64: 1, 192>}, {transform_indices = @transform_3, window_bounds = array<i64: 2, 192>}]} {
    %c0 = arith.constant 0 : index
    %c0_0 = arith.constant 0 : index
    %0 = vector.load %arg1[%c0, %c0_0] : memref<2x32xf32, #tpu.memory_space<vmem>>, vector<2x32xf32>
    %1 = arith.negf %0 : vector<2x32xf32>
    %2 = math.exp %1 : vector<2x32xf32>
    %cst = arith.constant 1.000000e+00 : f32
    %3 = vector.broadcast %cst : f32 to vector<2x32xf32>
    %4 = arith.addf %3, %2 : vector<2x32xf32>
    %5 = arith.divf %3, %4 : vector<2x32xf32>
    %6 = arith.mulf %0, %5 : vector<2x32xf32>
    %7 = arith.truncf %6 : vector<2x32xf32> to vector<2x32xbf16>
    %c0_1 = arith.constant 0 : index
    %c0_2 = arith.constant 0 : index
    %8 = vector.load %arg2[%c0_1, %c0_2] : memref<32x192xbf16, #tpu.memory_space<vmem>>, vector<32x192xbf16>
    %cst_3 = arith.constant dense<0.000000e+00> : vector<2x192xf32>
    %9 = tpu.matmul %7, %8, %cst_3 {dimension_numbers = #tpu.dot_dimension_numbers<[1], [0], [0], [1], [0, 0, 1, 1], [], []>} : vector<2x32xbf16>, vector<32x192xbf16>, vector<2x192xf32> -> vector<2x192xf32>
    %c0_4 = arith.constant 0 : index
    %c0_5 = arith.constant 0 : index
    %10 = vector.load %arg3[%c0_4, %c0_5] : memref<1x192xbf16, #tpu.memory_space<vmem>>, vector<1x192xbf16>
    %11 = arith.extf %10 : vector<1x192xbf16> to vector<1x192xf32>
    %12 = vector.broadcast %11 : vector<1x192xf32> to vector<2x192xf32>
    %13 = arith.addf %9, %12 : vector<2x192xf32>
    %c0_6 = arith.constant 0 : index
    %c0_7 = arith.constant 0 : index
    %14 = vector.load %arg4[%c0_6, %c0_7] : memref<2x192xf32, #tpu.memory_space<vmem>>, vector<2x192xf32>
    tpu.vector_store %arg4[%c0_6, %c0_7], %13 {strides = array<i32>} : memref<2x192xf32, #tpu.memory_space<vmem>>, vector<2x192xf32>,
    return
  }
  func.func @transform_0(%arg0: i32) -> (i32, i32) {
    %c0_i32 = arith.constant 0 : i32
    %c0_i32_0 = arith.constant 0 : i32
    %c0_i32_1 = arith.constant 0 : i32
    return %c0_i32, %c0_i32_0 : i32, i32
  }
  func.func @transform_1(%arg0: i32) -> (i32, i32) {
    %c0_i32 = arith.constant 0 : i32
    %c0_i32_0 = arith.constant 0 : i32
    return %c0_i32, %arg0 : i32, i32
  }
  func.func @transform_2(%arg0: i32) -> (i32, i32) {
    %c0_i32 = arith.constant 0 : i32
    %c0_i32_0 = arith.constant 0 : i32
    return %c0_i32, %arg0 : i32, i32
  }
  func.func @transform_3(%arg0: i32) -> (i32, i32) {
    %c0_i32 = arith.constant 0 : i32
    %c0_i32_0 = arith.constant 0 : i32
    return %c0_i32, %arg0 : i32, i32
  }
}

</mosaic_0001>

<llo_original>
// kernel: modulation_forward.1
$region0: #{modulation_forward.1}
  #allocation0 [shape = 'u32[]', space=smem, size = 0x4, offset = 0x4, fixed_abs, tag = 'smem constant byte address 0x4 - core index']
  #allocation1 [shape = 'u32[144,128]{1,0:T(1,128)}', space=vmem, size = 0x12000, scoped, tag = 'internal scratch']
  %s0 = inlined_call_operand.hbm [shape: f32[2,32], index: 0, kind: input, shape index: {}]
  %s1 = inlined_call_operand.hbm [shape: bf16[32,192], index: 1, kind: input, shape index: {}]
  %s2 = inlined_call_operand.vmem [shape: bf16[1,192], index: 2, kind: input, shape index: {}]
  %s3 = inlined_call_operand.vmem [shape: f32[2,192], index: 3, kind: output, shape index: {}]
  %s4 = sld [smem:[#allocation0]]
  $region30: #{modulation_forward.1} parent=0
    _
  %s6 = ssub.s32 1, %s4
  %s7 = scalar_select 0, %s6, %s4
  $region1: #{modulation_forward.1} parent=0
    #allocation2 [shape = 'u8[1024]{0}', space=vmem, size = 0x400, scoped, tag = 'input window, operand 0, single buffered']
    #allocation3 [shape = 's32[1]{0}', space=sflag, size = 0x4, scoped, tag = 'scoped memory for modulation_forward.1']
    #allocation4 [shape = 'u8[16384]{0}', space=vmem, size = 0x4000, scoped, tag = 'input window, operand 1, single buffered']
    #allocation5 [shape = 's32[1]{0}', space=sflag, size = 0x4, scoped, tag = 'scoped memory for modulation_forward.1']
    %8 = vsyncpa [#allocation3], 0
    %9 = vsyncpa [#allocation5], 0
    // Predicated region
    $region2: #{modulation_forward.1} parent=1 // pred_check
      _
    $region3: #{modulation_forward.1} parent=1 // pred_check_branch
      %11 = sbr.rel (0) target = $region5
    $region4: #{modulation_forward.1} parent=1 // pred_region
      %s13 = ssub.s32 32, 32
      %14 = vsyncadd [#allocation3], %s13
      %s16 = sshll.u32 [#allocation2], 4
      %s17 = int_to_ptr.vmem [resolvable:$true] %s16
      %19 = dma.hbm_to_vmem [thread:$0]  %s0, 32, %s17, [#allocation3]
    $region5: #{modulation_forward.1} parent=1 // pred_fallthru
      _
    // Predicated region
    $region6: #{modulation_forward.1} parent=1 // pred_check
      _
    $region7: #{modulation_forward.1} parent=1 // pred_check_branch
      %21 = sbr.rel (0) target = $region9
    $region8: #{modulation_forward.1} parent=1 // pred_region
      %s23 = ssub.s32 512, 512
      %24 = vsyncadd [#allocation5], %s23
      %s25 = sshll.u32 [#allocation4], 4
      %s26 = int_to_ptr.vmem [resolvable:$true] %s25
      %31 = dma.hbm_to_vmem [thread:$0]  %s1, 512, %s26, [#allocation5], 128, 128, 8
    $region9: #{modulation_forward.1} parent=1 // pred_fallthru
      _
    // Predicated region
    $region10: #{modulation_forward.1} parent=1 // pred_check
      _
    $region11: #{modulation_forward.1} parent=1 // pred_check_branch
      %33 = sbr.rel (0) target = $region13
    $region12: #{modulation_forward.1} parent=1 // pred_region
      _
    $region13: #{modulation_forward.1} parent=1 // pred_fallthru
      _
    // Predicated region
    $region14: #{modulation_forward.1} parent=1 // pred_check
      _
    $region15: #{modulation_forward.1} parent=1 // pred_check_branch
      %35 = sbr.rel (0) target = $region17
    $region16: #{modulation_forward.1} parent=1 // pred_region
      %36 = dma.done [#allocation3], 32
    $region17: #{modulation_forward.1} parent=1 // pred_fallthru
      _
    // Predicated region
    $region18: #{modulation_forward.1} parent=1 // pred_check
      _
    $region19: #{modulation_forward.1} parent=1 // pred_check_branch
      %38 = sbr.rel (0) target = $region21
    $region20: #{modulation_forward.1} parent=1 // pred_region
      %39 = dma.done [#allocation5], 512
    $region21: #{modulation_forward.1} parent=1 // pred_fallthru
      _
    %v41 = vld [vmem:[#allocation2] sm:$0x3]
    %v42 = vxor.u32 %v41, 2147483648
    %v43 = vmul.f32 %v42, 1.442695
    %v44 = vpow.pop %v43
    %v45 = vadd.f32 %v44, 1.0
    %v46 = vrcp.pop %v45
    %v47 = vmul.f32 1.0, %v46
    %v48 = vmul.f32 %v41, %v47
    %v49 = vpack.c.bf16 %v48, %v48
    %v50 = vld [vmem:[#allocation4] sm:$0xff]
    %v51 = vld [vmem:[#allocation4 + $0x8] sm:$0xff]
    %v52 = vld [vmem:[#allocation4 + $0x10] sm:$0xff]
    %v53 = vld [vmem:[#allocation4 + $0x18] sm:$0xff]
    %v54 = vld [vmem:[%s2] sm:$0x3]
    %v55 = vunpack.c.l.bf16 %v54
    %v57 = vlaneseq
    %v58 = vshrl.u32 %v57, 7
    %v59 = vsub.s32 0, %v58
    %v60 = vrot.slane %v55, %v59
    %v61 = vlaneseq
    %v62 = vshrl.u32 %v61, 7
    %v63 = vsub.s32 2, %v62
    %v64 = vrot.slane %v55, %v63
    %v67 = vlaneseq
    %v68 = vshrl.u32 %v67, 7
    %v69 = vsub.s32 0, %v68
    %v70 = vrot.slane %v60, %v69
    %v71 = vlaneseq
    %v72 = vshrl.u32 %v71, 7
    %v73 = vsub.s32 0, %v72
    %v74 = vrot.slane %v64, %v73
    %v79 = vunpack.c.l.b16 %v50
    %v80 = vunpack.c.h.b16 %v50
    %v81 = vunpack.c.l.b16 %v51
    %v82 = vunpack.c.h.b16 %v51
    %v83 = vunpack.c.l.b16 %v52
    %v84 = vunpack.c.h.b16 %v52
    %v85 = vunpack.c.l.b16 %v53
    %v86 = vunpack.c.h.b16 %v53
    %v87 = vpack.c.b16 %v81, %v79
    %v88 = vpack.c.b16 %v82, %v80
    %v89 = vpack.c.b16 %v85, %v83
    %v90 = vpack.c.b16 %v86, %v84
    %vm95 = vcmask 261120
    %v97 = vsel %vm95, %v49, 0
    %99 = vmatprep.subr.bf16.mxu0 %v88
    %100 = vmatpush1.bf16.msra.mxu0 %v87
    %101 = vmatprep.subr.bf16.mxu0 %v90
    %102 = vmatpush1.bf16.msra.mxu0 %v89
    %103 = vmatprep.subr.bf16.mxu0 0
    %104 = vmatpush1.bf16.msra.mxu0 0
    %105 = vmatprep.subr.bf16.mxu0 0
    %106 = vmatpush1.bf16.msra.mxu0 0
    %107 = vmatprep.subr.bf16.mxu0 0
    %108 = vmatpush1.bf16.msra.mxu0 0
    %109 = vmatprep.subr.bf16.mxu0 0
    %110 = vmatpush1.bf16.msra.mxu0 0
    %111 = vmatprep.subr.bf16.mxu0 0
    %112 = vmatpush1.bf16.msra.mxu0 0
    %113 = vmatprep.subr.bf16.mxu0 0
    %114 = vmatpush1.bf16.msra.mxu0 0
    %115 = vmatprep.subr.bf16.mxu0 0
    %116 = vmatpush1.bf16.msra.mxu0 0
    %117 = vmatprep.subr.bf16.mxu0 0
    %118 = vmatpush1.bf16.msra.mxu0 0
    %119 = vmatprep.subr.bf16.mxu0 0
    %120 = vmatpush1.bf16.msra.mxu0 0
    %121 = vmatprep.subr.bf16.mxu0 0
    %122 = vmatpush1.bf16.msra.mxu0 0
    %123 = vmatprep.subr.bf16.mxu0 0
    %124 = vmatpush1.bf16.msra.mxu0 0
    %125 = vmatprep.subr.bf16.mxu0 0
    %126 = vmatpush1.bf16.msra.mxu0 0
    %127 = vmatprep.subr.bf16.mxu0 0
    %128 = vmatpush1.bf16.msra.mxu0 0
    %129 = vmatprep.subr.bf16.mxu0 0
    %130 = vmatpush1.bf16.msra.mxu0 0
    %131 = vmatprep.mubr.bf16.mxu0 0
    %132 = vmatmul.mubr.bf16.gmra.mrb[0].mxu0 %v97
    %v133 = vpop.f32.mrb[0].mxu0
    %v134 = vadd.f32 %v70, %v133
    %v135 = vpop.f32.mrb[0].mxu0
    %v136 = vadd.f32 %v74, %v135
    %v137 = vpop.f32.mrb[0].mxu0
    %v138 = vpop.f32.mrb[0].mxu0
    %139 = vdwg.mxu0
    %v142 = vcombine.low %v134, %v136
    %v144 = vunpack.c.l.s4 1983009808
    %v145 = vunpack.c.0.s8 %v144
    %v146 = vlaneseq
    %v147 = vshrl.u32 %v146, 7
    %v148 = vsub.s32 %v145, %v147
    %v149 = vrot.slane %v142, %v148
    %vm151 = vcmask 1041408
    %vm152 = vcmask 519170
    %vm153 = vmor %vm152, %vm151
    %154 = vst.msk [vmem:[%s3] sm:$0xf] %vm153, %v149
    // Predicated region
    $region22: #{modulation_forward.1} parent=1 // pred_check
      _
    $region23: #{modulation_forward.1} parent=1 // pred_check_branch
      %156 = sbr.rel (0) target = $region25
    $region24: #{modulation_forward.1} parent=1 // pred_region
      _
    $region25: #{modulation_forward.1} parent=1 // pred_fallthru
      _
    // Predicated region
    $region26: #{modulation_forward.1} parent=1 // pred_check
      _
    $region27: #{modulation_forward.1} parent=1 // pred_check_branch
      %158 = sbr.rel (0) target = $region29
    $region28: #{modulation_forward.1} parent=1 // pred_region
      _
    $region29: #{modulation_forward.1} parent=1 // pred_fallthru
      _
    %159 = vsyncpa [#allocation3], 1
    %160 = vsyncpa [#allocation5], 1

</llo_original>
